<compile_context>
chip_gen: v6e
topology: v6e:2x2x1
jax: 0.10.0
libtpu: 0.0.40
codegen_flags: <defaults>
</compile_context>

<pallas_src>
import functools

import jax
import jax.numpy as jnp
from jax.experimental import pallas as pl
from jax.experimental.pallas import tpu as pltpu

EPS = 1e-6


def _round_up(a, m):
    return ((a + m - 1) // m) * m


def _cdiv(a, b):
    return (a + b - 1) // b


def _vmem_budget():
    """(target_input_tile_bytes, vmem_limit_bytes), generation aware.

    v5e / v6e: 128 MiB VMEM per TensorCore -> larger tiles + 96 MiB limit.
    v7x (64 MiB) or unknown hardware: conservative 4 MiB tiles / 48 MiB limit.
    """
    try:
        cap = int(pltpu.get_tpu_info().vmem_capacity_bytes)
    except Exception:
        cap = None
    if cap is not None and cap >= 100 * 1024 * 1024:
        return 6 * 1024 * 1024, 96 * 1024 * 1024
    return 4 * 1024 * 1024, 48 * 1024 * 1024


def _pick_row_tile(h, w, target_tile_bytes):
    """Output rows per grid step (multiple of 8), sized from the f32 input tile."""
    to = target_tile_bytes // max(1, 3 * 4 * w)
    to = max(8, (to // 8) * 8)
    to = min(to, _round_up(h + 2, 8))
    return to


def _grad_kernel(x_ref, halo_ref, o_ref, win_ref, *, height):
    # x_ref   : (1, 3, To, W)        main block  = input rows [t*To, t*To+To)
    # halo_ref: (1, 3, 8,  W)        halo block  = input rows [t*To-8, t*To)
    # o_ref   : (1, 3, To, Wo_store) output rows [t*To, t*To+To)
    # win_ref : (3, To+8, W+4)       zero-padded window; window row w holds
    #                                padded-input row P[t*To + w - 6], window
    #                                column c holds P column c (x at offset 2).
    t = pl.program_id(1)
    To = x_ref.shape[2]
    W = x_ref.shape[3]
    wo = W + 2
    row0 = t * To

    # --- border columns of the padded window must be zero every step --------
    zcol = jnp.zeros((3, To + 8, 2), jnp.float32)
    win_ref[:, :, 0:2] = zcol
    win_ref[:, :, W + 2:W + 4] = zcol

    # --- top halo: last 2 rows of the 8-row block above this tile -----------
    hk = jax.lax.broadcasted_iota(jnp.int32, (8, 1), 0)
    halo_valid = jnp.logical_and(t > 0, (row0 - 8 + hk) < height)       # (8,1)
    win_ref[:, 0:8, 2:2 + W] = jnp.where(
        halo_valid[None], halo_ref[0].astype(jnp.float32), 0.0)

    # --- main rows: mask only when the tile hangs over the bottom edge ------
    full = (row0 + To) <= height

    @pl.when(full)
    def _():
        win_ref[:, 8:8 + To, 2:2 + W] = x_ref[0].astype(jnp.float32)

    @pl.when(jnp.logical_not(full))
    def _():
        r = jax.lax.broadcasted_iota(jnp.int32, (To, 1), 0)
        valid = (row0 + r) < height                                     # (To,1)
        win_ref[:, 8:8 + To, 2:2 + W] = jnp.where(
            valid[None], x_ref[0].astype(jnp.float32), 0.0)

    # --- stencils: v = P[i+2,j+1]-P[i,j+1]   h = P[i+1,j+2]-P[i+1,j] --------
    v = win_ref[:, 8:8 + To, 1:1 + wo] - win_ref[:, 6:6 + To, 1:1 + wo]
    h = win_ref[:, 7:7 + To, 2:2 + wo] - win_ref[:, 7:7 + To, 0:wo]
    res = jnp.sqrt(v * v + h * h + EPS).astype(o_ref.dtype)             # (3,To,wo)

    if o_ref.shape[3] == wo:
        o_ref[0] = res
    else:  # lane-dense output: zero-fill the padding columns
        o_ref[0, :, :, 0:wo] = res
        o_ref[0, :, :, wo:] = jnp.zeros(
            (3, To, o_ref.shape[3] - wo), o_ref.dtype)


def get_gradient(x, *, row_tile=None, out_dtype=jnp.float32,
                 pad_output_lanes=False):
    """Pallas equivalent of DeepUnet Get_gradient.forward.

    x: (N, C>=3, H, W) float array (upcast to f32 in-kernel).
    Returns (N, 3, H+2, W+2) in `out_dtype`; if `pad_output_lanes` the last dim
    is zero-padded up to a multiple of 128 (consumer slices [..., :W+2]).
    """
    if x.ndim != 4 or x.shape[1] < 3:
        raise ValueError(f"expected (N, C>=3, H, W), got {x.shape}")
    n, _, hh, ww = x.shape
    ho, wo = hh + 2, ww + 2
    wo_store = _round_up(wo, 128) if pad_output_lanes else wo

    target_tile_bytes, vmem_limit = _vmem_budget()
    if row_tile is None:
        to = _pick_row_tile(hh, ww, target_tile_bytes)
    else:
        to = max(8, _round_up(int(row_tile), 8))
    num_row_tiles = _cdiv(ho, to)
    num_in_row_blocks = _cdiv(hh, to)      # last input row block starting in-bounds
    halo_blocks_per_tile = to // 8

    kernel = functools.partial(_grad_kernel, height=hh)

    return pl.pallas_call(
        kernel,
        out_shape=jax.ShapeDtypeStruct((n, 3, ho, wo_store), out_dtype),
        grid=(n, num_row_tiles),
        in_specs=[
            # Main block: input rows [t*to, t*to+to). The block index is
            # clamped for the bottom overhang tile; its rows are zero-masked.
            pl.BlockSpec(
                (1, 3, to, ww),
                lambda i, t: (i, 0, jnp.minimum(t, num_in_row_blocks - 1), 0)),
            # Halo block: the 8 input rows just above the tile; only its last
            # 2 rows are used (zeroed for t == 0 / past the bottom edge).
            pl.BlockSpec(
                (1, 3, 8, ww),
                lambda i, t: (i, 0,
                              jnp.maximum(t * halo_blocks_per_tile - 1, 0), 0)),
        ],
        out_specs=pl.BlockSpec((1, 3, to, wo_store), lambda i, t: (i, 0, t, 0)),
        scratch_shapes=[pltpu.VMEM((3, to + 8, ww + 4), jnp.float32)],
        compiler_params=pltpu.CompilerParams(
            dimension_semantics=("parallel", "parallel"),
            vmem_limit_bytes=vmem_limit),
    )(x, x)


def _reference(x):
    """Pure-JAX reference matching PyTorch F.conv2d(padding=2) semantics."""
    x3 = x[:, :3].astype(jnp.float32)
    xp = jnp.pad(x3, ((0, 0), (0, 0), (2, 2), (2, 2)))
    hh, ww = x3.shape[2], x3.shape[3]
    ho, wo = hh + 2, ww + 2
    v = xp[:, :, 2:2 + ho, 1:1 + wo] - xp[:, :, 0:ho, 1:1 + wo]
    h = xp[:, :, 1:1 + ho, 2:2 + wo] - xp[:, :, 1:1 + ho, 0:wo]
    return jnp.sqrt(v * v + h * h + EPS)


if __name__ == "__main__":
    key = jax.random.PRNGKey(0)
    x = jax.random.normal(key, (2, 4, 16, 16), dtype=jnp.float32)
    ref = _reference(x)

    # Default tiling (single row tile covering the whole image).
    out = jax.block_until_ready(get_gradient(x))
    assert out.shape == (2, 3, 18, 18), out.shape
    assert jnp.allclose(out, ref, atol=1e-5, rtol=1e-5)

    # Small explicit row tile: exercises the HBM halo fetch, the partial
    # bottom tile and the fully-overhanging last output tile.
    out_tiled = jax.block_until_ready(get_gradient(x, row_tile=8))
    assert out_tiled.shape == (2, 3, 18, 18), out_tiled.shape
    assert jnp.allclose(out_tiled, ref, atol=1e-5, rtol=1e-5)

    # Lane-dense output option (last dim padded to a multiple of 128).
    out_pad = jax.block_until_ready(
        get_gradient(x, row_tile=8, pad_output_lanes=True))
    assert out_pad.shape == (2, 3, 18, 128), out_pad.shape
    assert jnp.allclose(out_pad[..., :18], ref, atol=1e-5, rtol=1e-5)

    # bf16 output option (compute stays f32, only the final cast changes).
    out_bf16 = jax.block_until_ready(get_gradient(x, out_dtype=jnp.bfloat16))
    assert out_bf16.dtype == jnp.bfloat16
    assert jnp.allclose(out_bf16.astype(jnp.float32), ref, atol=2e-2, rtol=2e-2)

    print("KERNEL_OK")
</pallas_src>

<mosaic_0001>
module attributes {stable_mosaic.version = 11 : i64} {
  func.func @_grad_kernel(%arg0: i32, %arg1: i32, %arg2: memref<1x3x24x16xf32, #tpu.memory_space<vmem>>, %arg3: memref<1x3x8x16xf32, #tpu.memory_space<vmem>>, %arg4: memref<1x3x24x18xf32, #tpu.memory_space<vmem>>, %arg5: memref<3x32x20xf32, #tpu.memory_space<vmem>>) attributes {dimension_semantics = [#tpu.dimension_semantics<parallel>, #tpu.dimension_semantics<parallel>], iteration_bounds = array<i64: 2, 1>, scalar_prefetch = 0 : i64, scratch_operands = 1 : i64, tpu.core_type = #tpu.core_type<tc>, window_params = [{transform_indices = @transform_0, window_bounds = array<i64: 1, 3, 24, 16>}, {transform_indices = @transform_1, window_bounds = array<i64: 1, 3, 8, 16>}, {transform_indices = @transform_2, window_bounds = array<i64: 1, 3, 24, 18>}]} {
    %c24_i32 = arith.constant 24 : i32
    %0 = arith.muli %arg1, %c24_i32 : i32
    %cst = arith.constant 0.000000e+00 : f32
    %1 = vector.broadcast %cst : f32 to vector<3x32x2xf32>
    %c0 = arith.constant 0 : index
    %c0_0 = arith.constant 0 : index
    %c0_1 = arith.constant 0 : index
    %2 = vector.load %arg5[%c0, %c0_0, %c0_1] : memref<3x32x20xf32, #tpu.memory_space<vmem>>, vector<3x32x2xf32>
    tpu.vector_store %arg5[%c0, %c0_0, %c0_1], %1 {strides = array<i32>} : memref<3x32x20xf32, #tpu.memory_space<vmem>>, vector<3x32x2xf32>,
    %c0_2 = arith.constant 0 : index
    %c0_3 = arith.constant 0 : index
    %c18 = arith.constant 18 : index
    %3 = vector.load %arg5[%c0_2, %c0_3, %c18] : memref<3x32x20xf32, #tpu.memory_space<vmem>>, vector<3x32x2xf32>
    tpu.vector_store %arg5[%c0_2, %c0_3, %c18], %1 {strides = array<i32>} : memref<3x32x20xf32, #tpu.memory_space<vmem>>, vector<3x32x2xf32>,
    %4 = tpu.iota {dimensions = array<i32: 0>} : vector<8x1xi32>
    %c0_i32 = arith.constant 0 : i32
    %5 = arith.cmpi sgt, %arg1, %c0_i32 : i32
    %c8_i32 = arith.constant 8 : i32
    %6 = arith.subi %0, %c8_i32 : i32
    %7 = vector.broadcast %6 : i32 to vector<8x1xi32>
    %8 = arith.addi %7, %4 : vector<8x1xi32>
    %c16_i32 = arith.constant 16 : i32
    %9 = vector.broadcast %c16_i32 : i32 to vector<8x1xi32>
    %10 = arith.cmpi slt, %8, %9 : vector<8x1xi32>
    %11 = vector.broadcast %5 : i1 to vector<8x1xi1>
    %12 = arith.andi %11, %10 : vector<8x1xi1>
    %13 = vector.shape_cast %12 : vector<8x1xi1> to vector<1x8x1xi1>
    %c0_4 = arith.constant 0 : index
    %c0_5 = arith.constant 0 : index
    %c0_6 = arith.constant 0 : index
    %c0_7 = arith.constant 0 : index
    %14 = vector.load %arg3[%c0_4, %c0_5, %c0_6, %c0_7] : memref<1x3x8x16xf32, #tpu.memory_space<vmem>>, vector<1x3x8x16xf32>
    %15 = vector.shape_cast %14 : vector<1x3x8x16xf32> to vector<3x8x16xf32>
    %cst_8 = arith.constant 0.000000e+00 : f32
    %16 = vector.shape_cast %13 : vector<1x8x1xi1> to vector<1x8x1xi1>
    %17 = vector.broadcast %16 : vector<1x8x1xi1> to vector<3x8x16xi1>
    %18 = vector.broadcast %cst_8 : f32 to vector<3x8x16xf32>
    %19 = arith.select %17, %15, %18 : vector<3x8x16xi1>, vector<3x8x16xf32>
    %c0_9 = arith.constant 0 : index
    %c0_10 = arith.constant 0 : index
    %c2 = arith.constant 2 : index
    %20 = vector.load %arg5[%c0_9, %c0_10, %c2] : memref<3x32x20xf32, #tpu.memory_space<vmem>>, vector<3x8x16xf32>
    tpu.vector_store %arg5[%c0_9, %c0_10, %c2], %19 {strides = array<i32>} : memref<3x32x20xf32, #tpu.memory_space<vmem>>, vector<3x8x16xf32>,
    %c24_i32_11 = arith.constant 24 : i32
    %21 = arith.addi %0, %c24_i32_11 : i32
    %c16_i32_12 = arith.constant 16 : i32
    %22 = arith.cmpi sle, %21, %c16_i32_12 : i32
    %23 = arith.extui %22 : i1 to i32
    %c0_i32_13 = arith.constant 0 : i32
    %24 = arith.cmpi ne, %23, %c0_i32_13 : i32
    scf.if %24 {
      %c0_28 = arith.constant 0 : index
      %c0_29 = arith.constant 0 : index
      %c0_30 = arith.constant 0 : index
      %c0_31 = arith.constant 0 : index
      %43 = vector.load %arg2[%c0_28, %c0_29, %c0_30, %c0_31] : memref<1x3x24x16xf32, #tpu.memory_space<vmem>>, vector<1x3x24x16xf32>
      %44 = vector.shape_cast %43 : vector<1x3x24x16xf32> to vector<3x24x16xf32>
      %c0_32 = arith.constant 0 : index
      %c8_33 = arith.constant 8 : index
      %c2_34 = arith.constant 2 : index
      %45 = vector.load %arg5[%c0_32, %c8_33, %c2_34] : memref<3x32x20xf32, #tpu.memory_space<vmem>>, vector<3x24x16xf32>
      tpu.vector_store %arg5[%c0_32, %c8_33, %c2_34], %44 {strides = array<i32>} : memref<3x32x20xf32, #tpu.memory_space<vmem>>, vector<3x24x16xf32>,
    } else {
    }
    %true = arith.constant true
    %25 = arith.xori %22, %true : i1
    %26 = arith.extui %25 : i1 to i32
    %c0_i32_14 = arith.constant 0 : i32
    %27 = arith.cmpi ne, %26, %c0_i32_14 : i32
    scf.if %27 {
      %43 = tpu.iota {dimensions = array<i32: 0>} : vector<24x1xi32>
      %44 = vector.broadcast %0 : i32 to vector<24x1xi32>
      %45 = arith.addi %44, %43 : vector<24x1xi32>
      %c16_i32_28 = arith.constant 16 : i32
      %46 = vector.broadcast %c16_i32_28 : i32 to vector<24x1xi32>
      %47 = arith.cmpi slt, %45, %46 : vector<24x1xi32>
      %48 = vector.shape_cast %47 : vector<24x1xi1> to vector<1x24x1xi1>
      %c0_29 = arith.constant 0 : index
      %c0_30 = arith.constant 0 : index
      %c0_31 = arith.constant 0 : index
      %c0_32 = arith.constant 0 : index
      %49 = vector.load %arg2[%c0_29, %c0_30, %c0_31, %c0_32] : memref<1x3x24x16xf32, #tpu.memory_space<vmem>>, vector<1x3x24x16xf32>
      %50 = vector.shape_cast %49 : vector<1x3x24x16xf32> to vector<3x24x16xf32>
      %cst_33 = arith.constant 0.000000e+00 : f32
      %51 = vector.shape_cast %48 : vector<1x24x1xi1> to vector<1x24x1xi1>
      %52 = vector.broadcast %51 : vector<1x24x1xi1> to vector<3x24x16xi1>
      %53 = vector.broadcast %cst_33 : f32 to vector<3x24x16xf32>
      %54 = arith.select %52, %50, %53 : vector<3x24x16xi1>, vector<3x24x16xf32>
      %c0_34 = arith.constant 0 : index
      %c8_35 = arith.constant 8 : index
      %c2_36 = arith.constant 2 : index
      %55 = vector.load %arg5[%c0_34, %c8_35, %c2_36] : memref<3x32x20xf32, #tpu.memory_space<vmem>>, vector<3x24x16xf32>
      tpu.vector_store %arg5[%c0_34, %c8_35, %c2_36], %54 {strides = array<i32>} : memref<3x32x20xf32, #tpu.memory_space<vmem>>, vector<3x24x16xf32>,
    } else {
    }
    %c0_15 = arith.constant 0 : index
    %c8 = arith.constant 8 : index
    %c1 = arith.constant 1 : index
    %28 = vector.load %arg5[%c0_15, %c8, %c1] : memref<3x32x20xf32, #tpu.memory_space<vmem>>, vector<3x24x18xf32>
    %c0_16 = arith.constant 0 : index
    %c6 = arith.constant 6 : index
    %c1_17 = arith.constant 1 : index
    %29 = vector.load %arg5[%c0_16, %c6, %c1_17] : memref<3x32x20xf32, #tpu.memory_space<vmem>>, vector<3x24x18xf32>
    %30 = arith.subf %28, %29 : vector<3x24x18xf32>
    %c0_18 = arith.constant 0 : index
    %c7 = arith.constant 7 : index
    %c2_19 = arith.constant 2 : index
    %31 = vector.load %arg5[%c0_18, %c7, %c2_19] : memref<3x32x20xf32, #tpu.memory_space<vmem>>, vector<3x24x18xf32>
    %c0_20 = arith.constant 0 : index
    %c7_21 = arith.constant 7 : index
    %c0_22 = arith.constant 0 : index
    %32 = vector.load %arg5[%c0_20, %c7_21, %c0_22] : memref<3x32x20xf32, #tpu.memory_space<vmem>>, vector<3x24x18xf32>
    %33 = arith.subf %31, %32 : vector<3x24x18xf32>
    %34 = arith.mulf %30, %30 : vector<3x24x18xf32>
    %35 = arith.mulf %33, %33 : vector<3x24x18xf32>
    %36 = arith.addf %34, %35 : vector<3x24x18xf32>
    %cst_23 = arith.constant 9.99999997E-7 : f32
    %37 = vector.broadcast %cst_23 : f32 to vector<3x24x18xf32>
    %38 = arith.addf %36, %37 : vector<3x24x18xf32>
    %39 = math.sqrt %38 : vector<3x24x18xf32>
    %c0_24 = arith.constant 0 : index
    %c0_25 = arith.constant 0 : index
    %c0_26 = arith.constant 0 : index
    %c0_27 = arith.constant 0 : index
    %40 = vector.load %arg4[%c0_24, %c0_25, %c0_26, %c0_27] : memref<1x3x24x18xf32, #tpu.memory_space<vmem>>, vector<1x3x24x18xf32>
    %41 = vector.shape_cast %40 : vector<1x3x24x18xf32> to vector<3x24x18xf32>
    %42 = vector.shape_cast %39 : vector<3x24x18xf32> to vector<1x3x24x18xf32>
    tpu.vector_store %arg4[%c0_24, %c0_25, %c0_26, %c0_27], %42 {strides = array<i32>} : memref<1x3x24x18xf32, #tpu.memory_space<vmem>>, vector<1x3x24x18xf32>,
    return
  }
  func.func @transform_0(%arg0: i32, %arg1: i32) -> (i32, i32, i32, i32) {
    %c0_i32 = arith.constant 0 : i32
    %0 = arith.minsi %arg1, %c0_i32 : i32
    %c0_i32_0 = arith.constant 0 : i32
    %c0_i32_1 = arith.constant 0 : i32
    %c0_i32_2 = arith.constant 0 : i32
    return %arg0, %c0_i32_0, %0, %c0_i32_1 : i32, i32, i32, i32
  }
  func.func @transform_1(%arg0: i32, %arg1: i32) -> (i32, i32, i32, i32) {
    %c3_i32 = arith.constant 3 : i32
    %0 = arith.muli %arg1, %c3_i32 : i32
    %c1_i32 = arith.constant 1 : i32
    %1 = arith.subi %0, %c1_i32 : i32
    %c0_i32 = arith.constant 0 : i32
    %2 = arith.maxsi %1, %c0_i32 : i32
    %c0_i32_0 = arith.constant 0 : i32
    %c0_i32_1 = arith.constant 0 : i32
    %c0_i32_2 = arith.constant 0 : i32
    return %arg0, %c0_i32_0, %2, %c0_i32_1 : i32, i32, i32, i32
  }
  func.func @transform_2(%arg0: i32, %arg1: i32) -> (i32, i32, i32, i32) {
    %c0_i32 = arith.constant 0 : i32
    %c0_i32_0 = arith.constant 0 : i32
    %c0_i32_1 = arith.constant 0 : i32
    return %arg0, %c0_i32, %arg1, %c0_i32_0 : i32, i32, i32, i32
  }
}

</mosaic_0001>

<llo_original>
// kernel: tpu_custom_call.1
$region0: #{tpu_custom_call.1}
  #allocation0 [shape = 'u32[]', space=smem, size = 0x4, offset = 0x4, fixed_abs, tag = 'smem constant byte address 0x4 - core index']
  #allocation1 [shape = 'u32[144,128]{1,0:T(1,128)}', space=vmem, size = 0x12000, scoped, tag = 'internal scratch']
  #allocation2 [shape = 'f32[3,32,20]{2,1,0:T(8,128)}', space=vmem, size = 0xc000, scoped, tag = 'scratch operand']
  #allocation7 [shape = 's32[]', space=sflag, size = 0x4, offset = 0, fixed_abs, tag = 'sflag constant byte address 0x0 - dummy sync flag']
  %s0 = inlined_call_operand.hbm [shape: f32[2,4,16,16], index: 0, kind: input, shape index: {}]
  %s1 = inlined_call_operand.hbm [shape: f32[2,4,16,16], index: 1, kind: input, shape index: {}]
  %s2 = inlined_call_operand.vmem [shape: f32[2,3,18,18], index: 2, kind: output, shape index: {}]
  %s3 = sld [smem:[#allocation0]]
  $region57: #{tpu_custom_call.1} parent=0
    _
  %s5 = ssub.s32 1, %s3
  %s6 = scalar_select 0, %s5, %s3
  $region1: #{tpu_custom_call.1} parent=0
    #allocation3 [shape = 'u8[73728]{0}', space=vmem, size = 0x12000, scoped, tag = 'input window, operand 0']
    #allocation4 [shape = 's32[2]{0}', space=sflag, size = 0x8, scoped, tag = 'scoped memory for tpu_custom_call.1']
    #allocation5 [shape = 'u8[24576]{0}', space=vmem, size = 0x6000, scoped, tag = 'input window, operand 1']
    #allocation6 [shape = 's32[2]{0}', space=sflag, size = 0x8, scoped, tag = 'scoped memory for tpu_custom_call.1']
    %7 = vsyncpa [#allocation4], 0
    %s8 = scalar_lea.sflag [#allocation4], 1
    %9 = vsyncpa %s8, 0
    %10 = vsyncpa [#allocation6], 0
    %s11 = scalar_lea.sflag [#allocation6], 1
    %12 = vsyncpa %s11, 0
    loop: start=0, step=1, limit=4
    $region2: #{tpu_custom_call.1} parent=1 // loop_pre_header
      _
    $region3: #{tpu_custom_call.1} parent=1 // loop_header
      %s14 = sphi 0, %s18
      %p15 = scmp.ge.s32.totalorder %s14, 4
      %s21 = sphi 0, %s33
      %s22 = sphi 0, %s29
      %s23 = sphi 0, %s21
      %s24 = sphi 0, %s22
      %s25 = sphi 0, %s23
      %s26 = sphi 0, %s24
      %s42 = sphi 0, %s44
      %s45 = sphi 0, %s42
      %s46 = sphi 0, %s45
      %s62 = sphi 0, %s46
      %s78 = sphi 0, %s80
      %s81 = sphi 0, %s78
      %s82 = sphi 0, %s81
      %s98 = sphi 0, %s82
      %s106 = sphi 0, %s108
      %s109 = sphi 0, %s106
      %s110 = sphi 0, %s109
      %s126 = sphi 0, %s110
    $region4: #{tpu_custom_call.1} parent=1 // loop_header_branch
      %17 = sbr.rel (%p15) target = $region8
    $region5: #{tpu_custom_call.1} parent=1 // loop_body
      %s19 = ssub.s32 %s14, 1
      %s20 = ssub.s32 %s14, 2
      %s27 = sadd.s32 1, %s22
      %p28 = scmp.ge.s32.totalorder %s27, 1
      %s29 = scalar_select %p28, 0, %s27
      %s30 = sadd.s32 1, %s21
      %s31 = scalar_select %p28, %s30, %s21
      %p32 = scmp.ge.s32.totalorder %s31, 2
      %s33 = scalar_select %p32, 0, %s31
      %p34 = scmp.lt.s32.totalorder %s22, 0
      %s35 = scalar_select %p34, %s22, 0
      %p36 = scmp.lt.s32.totalorder %s29, 0
      %s37 = scalar_select %p36, %s29, 0
      %s38 = ssub.s32 %s21, %s33
      %s39 = ssub.s32 %s35, %s37
      %s40 = sor.u32 %s38, %s39
      %p41 = scmp.eq.s32.totalorder %s40, 0
      %s43 = sadd.s32 %s42, 1
      %s44 = scalar_select %p41, %s42, %s43
      %p47 = pneg %p41
      %p48 = scmp.eq.s32.totalorder %s14, 1
      %p49 = por %p47, %p48
      %p50 = scmp.ne.s32.totalorder %s42, %s45
      %p51 = scmp.eq.s32.totalorder %s14, 0
      %p52 = por %p50, %p51
      %p53 = scmp.ne.s32.totalorder %s42, %s45
      %p54 = scmp.eq.s32.totalorder %s19, 1
      %p55 = por %p53, %p54
      %p56 = scmp.ne.s32.totalorder %s45, %s46
      %p57 = scmp.eq.s32.totalorder %s19, 0
      %p58 = por %p56, %p57
      %p59 = scmp.ne.s32.totalorder %s45, %s46
      %p60 = scmp.eq.s32.totalorder %s20, 1
      %p61 = por %p59, %p60
      %p63 = scmp.ne.s32.totalorder %s46, %s62
      %p64 = scmp.eq.s32.totalorder %s20, 0
      %p65 = por %p63, %p64
      %s66 = smul.u32 %s22, 3
      %s67 = ssub.s32 %s66, 1
      %p68 = scmp.gt.s32.totalorder %s67, 0
      %s69 = scalar_select %p68, %s67, 0
      %s70 = smul.u32 %s29, 3
      %s71 = ssub.s32 %s70, 1
      %p72 = scmp.gt.s32.totalorder %s71, 0
      %s73 = scalar_select %p72, %s71, 0
      %s74 = ssub.s32 %s21, %s33
      %s75 = ssub.s32 %s69, %s73
      %s76 = sor.u32 %s74, %s75
      %p77 = scmp.eq.s32.totalorder %s76, 0
      %s79 = sadd.s32 %s78, 1
      %s80 = scalar_select %p77, %s78, %s79
      %p83 = pneg %p77
      %p84 = scmp.eq.s32.totalorder %s14, 1
      %p85 = por %p83, %p84
      %p86 = scmp.ne.s32.totalorder %s78, %s81
      %p87 = scmp.eq.s32.totalorder %s14, 0
      %p88 = por %p86, %p87
      %p89 = scmp.ne.s32.totalorder %s78, %s81
      %p90 = scmp.eq.s32.totalorder %s19, 1
      %p91 = por %p89, %p90
      %p92 = scmp.ne.s32.totalorder %s81, %s82
      %p93 = scmp.eq.s32.totalorder %s19, 0
      %p94 = por %p92, %p93
      %p95 = scmp.ne.s32.totalorder %s81, %s82
      %p96 = scmp.eq.s32.totalorder %s20, 1
      %p97 = por %p95, %p96
      %p99 = scmp.ne.s32.totalorder %s82, %s98
      %p100 = scmp.eq.s32.totalorder %s20, 0
      %p101 = por %p99, %p100
      %s102 = ssub.s32 %s21, %s33
      %s103 = ssub.s32 %s22, %s29
      %s104 = sor.u32 %s102, %s103
      %p105 = scmp.eq.s32.totalorder %s104, 0
      %s107 = sadd.s32 %s106, 1
      %s108 = scalar_select %p105, %s106, %s107
      %p111 = pneg %p105
      %p112 = scmp.eq.s32.totalorder %s14, 1
      %p113 = por %p111, %p112
      %p114 = scmp.ne.s32.totalorder %s106, %s109
      %p115 = scmp.eq.s32.totalorder %s14, 0
      %p116 = por %p114, %p115
      %p117 = scmp.ne.s32.totalorder %s106, %s109
      %p118 = scmp.eq.s32.totalorder %s19, 1
      %p119 = por %p117, %p118
      %p120 = scmp.ne.s32.totalorder %s109, %s110
      %p121 = scmp.eq.s32.totalorder %s19, 0
      %p122 = por %p120, %p121
      %p123 = scmp.ne.s32.totalorder %s109, %s110
      %p124 = scmp.eq.s32.totalorder %s20, 1
      %p125 = por %p123, %p124
      %p127 = scmp.ne.s32.totalorder %s110, %s126
      %p128 = scmp.eq.s32.totalorder %s20, 0
      %p129 = por %p127, %p128
      %p130 = scmp.le.s32.totalorder 1, %s14
      %p131 = scmp.lt.s32.totalorder %s14, 3
      %p132 = pnand %p130, %p131
      %p133 = pneg %p132
      // Predicated region
      $region9: #{tpu_custom_call.1} parent=5 // pred_check
        _
      $region10: #{tpu_custom_call.1} parent=5 // pred_check_branch
        %135 = sbr.rel (%p132) target = $region12
      $region11: #{tpu_custom_call.1} parent=5 // pred_region
        %s136 = ssub.s32 %s14, 1
      $region12: #{tpu_custom_call.1} parent=5 // pred_fallthru
        _
      %p137 = scmp.lt.s32.totalorder %s14, 2
      // Predicated region
      $region13: #{tpu_custom_call.1} parent=5 // pred_check
        %p138 = pneg %p137
      $region14: #{tpu_custom_call.1} parent=5 // pred_check_branch
        %140 = sbr.rel (%p138) target = $region16
      $region15: #{tpu_custom_call.1} parent=5 // pred_region
        // Predicated region
        $region17: #{tpu_custom_call.1} parent=15 // pred_check
          %p141 = pneg %p52
        $region18: #{tpu_custom_call.1} parent=15 // pred_check_branch
          %143 = sbr.rel (%p141) target = $region20
        $region19: #{tpu_custom_call.1} parent=15 // pred_region
          #allocation8 [shape = 'u32[6]{0}', space=smem, size = 0x18, scoped, tag = 'DMA stride descriptor']
          %s144 = sand.u32 %s42, 1
          %s145 = scalar_lea.sflag [#allocation4], %s144
          %s146 = sand.u32 %s42, 1
          %s147 = smul.addr %s146, 72
          %s148 = scalar_lea.vmem [#allocation3], %s147
          %p149 = scmp.lt.s32.totalorder %s22, 0
          %s150 = scalar_select %p149, %s22, 0
          %s151 = smul.u32 3, %s150
          %s152 = ssub.s32 2, %s151
          %s153 = smul.u32 384, %s152
          %s155 = ssub.s32 1152, %s153
          %156 = vsyncadd %s145, %s155
          %p157 = scmp.ne.s32.totalorder 0, %s153
          %s158 = smul.addr %s21, 8
          %s159 = sadd.s32 %s151, %s158
          %s160 = smul.addr %s159, 128
          %s161 = scalar_lea.hbm %s0, %s160
          %s162 = smul.u32 8, %s152
          %s163 = smul.u32 %s162, 3
          %s165 = sshll.u32 1, 14
          %s166 = sxor.u32 4294967295, %s165
          %s168 = sld [smem:[#allocation0]]
          %s169 = sadd.s32 2, %s168
          %s171 = sshll.u32 7, 26
          %s172 = sxor.u32 4294967295, %s171
          %s173 = sand.u32 0, %s172
          %s174 = sshll.u32 %s169, 26
          %s175 = sor.u32 %s173, %s174
          %s176 = sshll.u32 %s148, 4
          %s177 = int_to_ptr.vmem [resolvable:$true] %s176
          %s178 = sshll.u32 %s163, 4
          %183 = sst [smem:[#allocation8]] 256
          %s184 = scalar_lea.smem [#allocation8], 1
          %185 = sst [smem:[%s184]] 384
          %s186 = scalar_lea.smem [#allocation8], 2
          %187 = sst [smem:[%s186]] %s152
          %s188 = scalar_lea.smem [#allocation8], 3
          %189 = sst [smem:[%s188]] 128
          %s190 = scalar_lea.smem [#allocation8], 4
          %191 = sst [smem:[%s190]] 128
          %s192 = scalar_lea.smem [#allocation8], 5
          %193 = sst [smem:[%s192]] 8
          %195 = dma.general (%p157), %s161, %s178, %s177, %s145, 131072, [#allocation8], %s175, 0
        $region20: #{tpu_custom_call.1} parent=15 // pred_fallthru
          _
        // Predicated region
        $region21: #{tpu_custom_call.1} parent=15 // pred_check
          %p196 = pneg %p88
        $region22: #{tpu_custom_call.1} parent=15 // pred_check_branch
          %198 = sbr.rel (%p196) target = $region24
        $region23: #{tpu_custom_call.1} parent=15 // pred_region
          %s199 = sand.u32 %s78, 1
          %s200 = scalar_lea.sflag [#allocation6], %s199
          %s201 = sand.u32 %s78, 1
          %s202 = smul.addr %s201, 24
          %s203 = scalar_lea.vmem [#allocation5], %s202
          %s204 = smul.u32 %s22, 3
          %s205 = ssub.s32 %s204, 1
          %p206 = scmp.gt.s32.totalorder %s205, 0
          %s207 = scalar_select %p206, %s205, 0
          %s209 = ssub.s32 384, 384
          %210 = vsyncadd %s200, %s209
          %s211 = smul.addr %s21, 8
          %s212 = sadd.s32 %s207, %s211
          %s213 = smul.addr %s212, 128
          %s214 = scalar_lea.hbm %s1, %s213
          %s215 = sshll.u32 %s203, 4
          %s216 = int_to_ptr.vmem [resolvable:$true] %s215
          %221 = dma.hbm_to_vmem [thread:$0]  %s214, 384, %s216, %s200, 256, 128, 8
        $region24: #{tpu_custom_call.1} parent=15 // pred_fallthru
          _
      $region16: #{tpu_custom_call.1} parent=5 // pred_fallthru
        _
      %p222 = scmp.le.s32.totalorder 1, %s14
      %p223 = scmp.lt.s32.totalorder %s14, 3
      %p224 = pnand %p222, %p223
      %p225 = pneg %p224
      // Predicated region
      $region25: #{tpu_custom_call.1} parent=5 // pred_check
        _
      $region26: #{tpu_custom_call.1} parent=5 // pred_check_branch
        %227 = sbr.rel (%p224) target = $region28
      $region27: #{tpu_custom_call.1} parent=5 // pred_region
        %s228 = ssub.s32 %s14, 1
        %s229 = sand.u32 %s45, 1
        %s230 = scalar_lea.sflag [#allocation4], %s229
        %s231 = sand.u32 %s45, 1
        %s232 = smul.addr %s231, 72
        %s233 = scalar_lea.vmem [#allocation3], %s232
        // Predicated region
        $region29: #{tpu_custom_call.1} parent=27 // pred_check
          %p234 = pneg %p58
        $region30: #{tpu_custom_call.1} parent=27 // pred_check_branch
          %236 = sbr.rel (%p234) target = $region32
        $region31: #{tpu_custom_call.1} parent=27 // pred_region
          %237 = dma.done %s230, 1152
        $region32: #{tpu_custom_call.1} parent=27 // pred_fallthru
          _
        %s238 = sand.u32 %s81, 1
        %s239 = scalar_lea.sflag [#allocation6], %s238
        %s240 = sand.u32 %s81, 1
        %s241 = smul.addr %s240, 24
        %s242 = scalar_lea.vmem [#allocation5], %s241
        // Predicated region
        $region33: #{tpu_custom_call.1} parent=27 // pred_check
          %p243 = pneg %p94
        $region34: #{tpu_custom_call.1} parent=27 // pred_check_branch
          %245 = sbr.rel (%p243) target = $region36
        $region35: #{tpu_custom_call.1} parent=27 // pred_region
          %246 = dma.done %s239, 384
        $region36: #{tpu_custom_call.1} parent=27 // pred_fallthru
          _
        %s247 = sand.u32 %s45, 1
        %s248 = scalar_lea.sflag [#allocation4], %s247
        %s249 = sand.u32 %s45, 1
        %s250 = smul.addr %s249, 72
        %s251 = scalar_lea.vmem [#allocation3], %s250
        %p252 = pneg %p58
        %p253 = pneg %p55
        %s254 = sand.u32 %s81, 1
        %s255 = scalar_lea.sflag [#allocation6], %s254
        %s256 = sand.u32 %s81, 1
        %s257 = smul.addr %s256, 24
        %s258 = scalar_lea.vmem [#allocation5], %s257
        %p259 = pneg %p94
        %p260 = pneg %p91
        %p261 = pneg %p122
        %p262 = pneg %p119
        %s263 = smul.u32 3, %s24
        %p264 = scmp.lt.s32.totalorder %s23, 1
        %s265 = scalar_select %p264, %s23, 1
        %p266 = scmp.lt.s32.totalorder %s263, 2
        %s267 = scalar_select %p266, %s263, 2
        %s268 = smul.addr %s265, 9
        %s269 = sadd.s32 %s267, %s268
        %s270 = smul.addr %s269, 8
        %s271 = scalar_lea.vmem %s2, %s270
        %p272 = scmp.lt.s32.totalorder %s24, 0
        %s273 = scalar_select %p272, %s24, 0
        %s274 = smul.u32 3, %s273
        %s275 = ssub.s32 2, %s274
        %s276 = smul.u32 384, %s275
        %s277 = smul.u32 %s24, 3
        %s278 = ssub.s32 %s277, 1
        %p279 = scmp.gt.s32.totalorder %s278, 0
        %s280 = scalar_select %p279, %s278, 0
        %s281 = smul.u32 3, %s24
        %p282 = scmp.lt.s32.totalorder %s23, 1
        %s283 = scalar_select %p282, %s23, 1
        %p284 = scmp.lt.s32.totalorder %s281, 2
        %s285 = scalar_select %p284, %s281, 2
        %s286 = smul.addr %s283, 9
        %s287 = sadd.s32 %s285, %s286
        %s288 = smul.addr %s287, 8
        %s289 = scalar_lea.vmem %s2, %s288
        %s290 = smul.u32 3, %s24
        %s291 = smul.u32 %s24, 24
        %vm292 = vcmask 15360
        %293 = vst.msk [vmem:[#allocation2] sm:$0xff] %vm292, 0.0
        %294 = vst.msk [vmem:[#allocation2 + $0x8] sm:$0xff] %vm292, 0.0
        %295 = vst.msk [vmem:[#allocation2 + $0x10] sm:$0xff] %vm292, 0.0
        %296 = vst.msk [vmem:[#allocation2 + $0x18] sm:$0xff] %vm292, 0.0
        %297 = vst.msk [vmem:[#allocation2 + $0x20] sm:$0xff] %vm292, 0.0
        %298 = vst.msk [vmem:[#allocation2 + $0x28] sm:$0xff] %vm292, 0.0
        %299 = vst.msk [vmem:[#allocation2 + $0x30] sm:$0xff] %vm292, 0.0
        %300 = vst.msk [vmem:[#allocation2 + $0x38] sm:$0xff] %vm292, 0.0
        %301 = vst.msk [vmem:[#allocation2 + $0x40] sm:$0xff] %vm292, 0.0
        %302 = vst.msk [vmem:[#allocation2 + $0x48] sm:$0xff] %vm292, 0.0
        %303 = vst.msk [vmem:[#allocation2 + $0x50] sm:$0xff] %vm292, 0.0
        %304 = vst.msk [vmem:[#allocation2 + $0x58] sm:$0xff] %vm292, 0.0
        %vm305 = vcmask 162960
        %306 = vst.msk [vmem:[#allocation2] sm:$0xff] %vm305, 0.0
        %307 = vst.msk [vmem:[#allocation2 + $0x8] sm:$0xff] %vm305, 0.0
        %308 = vst.msk [vmem:[#allocation2 + $0x10] sm:$0xff] %vm305, 0.0
        %309 = vst.msk [vmem:[#allocation2 + $0x18] sm:$0xff] %vm305, 0.0
        %310 = vst.msk [vmem:[#allocation2 + $0x20] sm:$0xff] %vm305, 0.0
        %311 = vst.msk [vmem:[#allocation2 + $0x28] sm:$0xff] %vm305, 0.0
        %312 = vst.msk [vmem:[#allocation2 + $0x30] sm:$0xff] %vm305, 0.0
        %313 = vst.msk [vmem:[#allocation2 + $0x38] sm:$0xff] %vm305, 0.0
        %314 = vst.msk [vmem:[#allocation2 + $0x40] sm:$0xff] %vm305, 0.0
        %315 = vst.msk [vmem:[#allocation2 + $0x48] sm:$0xff] %vm305, 0.0
        %316 = vst.msk [vmem:[#allocation2 + $0x50] sm:$0xff] %vm305, 0.0
        %317 = vst.msk [vmem:[#allocation2 + $0x58] sm:$0xff] %vm305, 0.0
        %v318 = vlaneseq
        %v319 = vshrl.u32 %v318, 7
        %p320 = scmp.gt.s32.totalorder %s24, 0
        %s321 = ssub.s32 %s291, 8
        %v322 = vstv %s321
        %v323 = vadd.s32 %v322, %v319
        %vm324 = vcmp.lt.s32.totalorder %v323, 16
        %s325 = scalar_select %p320, 1, 0
        %v326 = vstv %s325
        %vm327 = vcmp.eq.s32.totalorder %v326, 1
        %vm328 = vmand %vm327, %vm324
        %v329 = vld [vmem:[%s242] sm:$0xff]
        %v330 = vld [vmem:[%s242 + $0x8] sm:$0xff]
        %v331 = vld [vmem:[%s242 + $0x10] sm:$0xff]
        %v332 = vsel %vm328, 1, 0
        %vm333 = vcmp.eq.s32.totalorder %v332, 1
        %v334 = vsel %vm333, %v329, 0.0
        %v335 = vsel %vm333, %v330, 0.0
        %v336 = vsel %vm333, %v331, 0.0
        %340 = vrot.lane.b32.xlu0 %v334, 2
        %v341 = vpop.permute.xlu0 %340
        %342 = vrot.lane.b32.xlu0 %v335, 2
        %v343 = vpop.permute.xlu0 %342
        %344 = vrot.lane.b32.xlu0 %v336, 2
        %v345 = vpop.permute.xlu0 %344
        %vm349 = vcmask 146448
        %350 = vst.msk [vmem:[#allocation2] sm:$0xff] %vm349, %v341
        %351 = vst.msk [vmem:[#allocation2 + $0x20] sm:$0xff] %vm349, %v343
        %352 = vst.msk [vmem:[#allocation2 + $0x40] sm:$0xff] %vm349, %v345
        %s353 = sadd.s32 %s291, 24
        %p354 = scmp.le.s32.totalorder %s353, 16
        // Predicated region
        $region37: #{tpu_custom_call.1} parent=27 // pred_check
          %p355 = pneg %p354
        $region38: #{tpu_custom_call.1} parent=27 // pred_check_branch
          %357 = sbr.rel (%p355) target = $region40
        $region39: #{tpu_custom_call.1} parent=27 // pred_region
          %v358 = vld [vmem:[%s233] sm:$0xff]
          %v359 = vld [vmem:[%s233 + $0x8] sm:$0xff]
          %v360 = vld [vmem:[%s233 + $0x10] sm:$0xff]
          %v361 = vld [vmem:[%s233 + $0x18] sm:$0xff]
          %v362 = vld [vmem:[%s233 + $0x20] sm:$0xff]
          %v363 = vld [vmem:[%s233 + $0x28] sm:$0xff]
          %v364 = vld [vmem:[%s233 + $0x30] sm:$0xff]
          %v365 = vld [vmem:[%s233 + $0x38] sm:$0xff]
          %v366 = vld [vmem:[%s233 + $0x40] sm:$0xff]
          %376 = vrot.lane.b32.xlu0 %v358, 2
          %v377 = vpop.permute.xlu0 %376
          %378 = vrot.lane.b32.xlu0 %v359, 2
          %v379 = vpop.permute.xlu0 %378
          %380 = vrot.lane.b32.xlu0 %v360, 2
          %v381 = vpop.permute.xlu0 %380
          %382 = vrot.lane.b32.xlu0 %v361, 2
          %v383 = vpop.permute.xlu0 %382
          %384 = vrot.lane.b32.xlu0 %v362, 2
          %v385 = vpop.permute.xlu0 %384
          %386 = vrot.lane.b32.xlu0 %v363, 2
          %v387 = vpop.permute.xlu0 %386
          %388 = vrot.lane.b32.xlu0 %v364, 2
          %v389 = vpop.permute.xlu0 %388
          %390 = vrot.lane.b32.xlu0 %v365, 2
          %v391 = vpop.permute.xlu0 %390
          %392 = vrot.lane.b32.xlu0 %v366, 2
          %v393 = vpop.permute.xlu0 %392
          %403 = vst.msk [vmem:[#allocation2 + $0x8] sm:$0xff] %vm349, %v377
          %404 = vst.msk [vmem:[#allocation2 + $0x10] sm:$0xff] %vm349, %v379
          %405 = vst.msk [vmem:[#allocation2 + $0x18] sm:$0xff] %vm349, %v381
          %406 = vst.msk [vmem:[#allocation2 + $0x28] sm:$0xff] %vm349, %v383
          %407 = vst.msk [vmem:[#allocation2 + $0x30] sm:$0xff] %vm349, %v385
          %408 = vst.msk [vmem:[#allocation2 + $0x38] sm:$0xff] %vm349, %v387
          %409 = vst.msk [vmem:[#allocation2 + $0x48] sm:$0xff] %vm349, %v389
          %410 = vst.msk [vmem:[#allocation2 + $0x50] sm:$0xff] %vm349, %v391
          %411 = vst.msk [vmem:[#allocation2 + $0x58] sm:$0xff] %vm349, %v393
        $region40: #{tpu_custom_call.1} parent=27 // pred_fallthru
          _
        %p412 = scmp.gt.s32.totalorder %s353, 16
        // Predicated region
        $region41: #{tpu_custom_call.1} parent=27 // pred_check
          %p413 = pneg %p412
        $region42: #{tpu_custom_call.1} parent=27 // pred_check_branch
          %415 = sbr.rel (%p413) target = $region44
        $region43: #{tpu_custom_call.1} parent=27 // pred_region
          %v416 = vadd.s32 %v319, 8
          %v417 = vadd.s32 %v319, 16
          %v418 = vstv %s291
          %v419 = vadd.s32 %v418, %v319
          %v420 = vadd.s32 %v418, %v416
          %v421 = vadd.s32 %v418, %v417
          %vm422 = vcmp.lt.s32.totalorder %v419, 16
          %vm423 = vcmp.lt.s32.totalorder %v420, 16
          %vm424 = vcmp.lt.s32.totalorder %v421, 16
          %v425 = vld [vmem:[%s233] sm:$0xff]
          %v426 = vld [vmem:[%s233 + $0x8] sm:$0xff]
          %v427 = vld [vmem:[%s233 + $0x10] sm:$0xff]
          %v428 = vld [vmem:[%s233 + $0x18] sm:$0xff]
          %v429 = vld [vmem:[%s233 + $0x20] sm:$0xff]
          %v430 = vld [vmem:[%s233 + $0x28] sm:$0xff]
          %v431 = vld [vmem:[%s233 + $0x30] sm:$0xff]
          %v432 = vld [vmem:[%s233 + $0x38] sm:$0xff]
          %v433 = vld [vmem:[%s233 + $0x40] sm:$0xff]
          %v434 = vsel %vm422, 1, 0
          %v435 = vsel %vm423, 1, 0
          %v436 = vsel %vm424, 1, 0
          %vm437 = vcmp.eq.s32.totalorder %v434, 1
          %vm438 = vcmp.eq.s32.totalorder %v435, 1
          %vm439 = vcmp.eq.s32.totalorder %v436, 1
          %v440 = vsel %vm437, %v425, 0.0
          %v441 = vsel %vm438, %v426, 0.0
          %v442 = vsel %vm439, %v427, 0.0
          %v443 = vsel %vm437, %v428, 0.0
          %v444 = vsel %vm438, %v429, 0.0
          %v445 = vsel %vm439, %v430, 0.0
          %v446 = vsel %vm437, %v431, 0.0
          %v447 = vsel %vm438, %v432, 0.0
          %v448 = vsel %vm439, %v433, 0.0
          %458 = vrot.lane.b32.xlu0 %v440, 2
          %v459 = vpop.permute.xlu0 %458
          %460 = vrot.lane.b32.xlu0 %v441, 2
          %v461 = vpop.permute.xlu0 %460
          %462 = vrot.lane.b32.xlu0 %v442, 2
          %v463 = vpop.permute.xlu0 %462
          %464 = vrot.lane.b32.xlu0 %v443, 2
          %v465 = vpop.permute.xlu0 %464
          %466 = vrot.lane.b32.xlu0 %v444, 2
          %v467 = vpop.permute.xlu0 %466
          %468 = vrot.lane.b32.xlu0 %v445, 2
          %v469 = vpop.permute.xlu0 %468
          %470 = vrot.lane.b32.xlu0 %v446, 2
          %v471 = vpop.permute.xlu0 %470
          %472 = vrot.lane.b32.xlu0 %v447, 2
          %v473 = vpop.permute.xlu0 %472
          %474 = vrot.lane.b32.xlu0 %v448, 2
          %v475 = vpop.permute.xlu0 %474
          %485 = vst.msk [vmem:[#allocation2 + $0x8] sm:$0xff] %vm349, %v459
          %486 = vst.msk [vmem:[#allocation2 + $0x10] sm:$0xff] %vm349, %v461
          %487 = vst.msk [vmem:[#allocation2 + $0x18] sm:$0xff] %vm349, %v463
          %488 = vst.msk [vmem:[#allocation2 + $0x28] sm:$0xff] %vm349, %v465
          %489 = vst.msk [vmem:[#allocation2 + $0x30] sm:$0xff] %vm349, %v467
          %490 = vst.msk [vmem:[#allocation2 + $0x38] sm:$0xff] %vm349, %v469
          %491 = vst.msk [vmem:[#allocation2 + $0x48] sm:$0xff] %vm349, %v471
          %492 = vst.msk [vmem:[#allocation2 + $0x50] sm:$0xff] %vm349, %v473
          %493 = vst.msk [vmem:[#allocation2 + $0x58] sm:$0xff] %vm349, %v475
        $region44: #{tpu_custom_call.1} parent=27 // pred_fallthru
          _
        %v494 = vld [vmem:[#allocation2 + $0x8] sm:$0xff]
        %v495 = vld [vmem:[#allocation2 + $0x10] sm:$0xff]
        %v496 = vld [vmem:[#allocation2 + $0x18] sm:$0xff]
        %v497 = vld [vmem:[#allocation2 + $0x28] sm:$0xff]
        %v498 = vld [vmem:[#allocation2 + $0x30] sm:$0xff]
        %v499 = vld [vmem:[#allocation2 + $0x38] sm:$0xff]
        %v500 = vld [vmem:[#allocation2 + $0x48] sm:$0xff]
        %v501 = vld [vmem:[#allocation2 + $0x50] sm:$0xff]
        %v502 = vld [vmem:[#allocation2 + $0x58] sm:$0xff]
        %v503 = vld [vmem:[#allocation2 + $0x6] sm:$0xff]
        %v504 = vld [vmem:[#allocation2 + $0xe] sm:$0xff]
        %v505 = vld [vmem:[#allocation2 + $0x16] sm:$0xff]
        %v506 = vld [vmem:[#allocation2 + $0x26] sm:$0xff]
        %v507 = vld [vmem:[#allocation2 + $0x2e] sm:$0xff]
        %v508 = vld [vmem:[#allocation2 + $0x36] sm:$0xff]
        %v509 = vld [vmem:[#allocation2 + $0x46] sm:$0xff]
        %v510 = vld [vmem:[#allocation2 + $0x4e] sm:$0xff]
        %v511 = vld [vmem:[#allocation2 + $0x56] sm:$0xff]
        %v512 = vsub.f32 %v494, %v503
        %v513 = vsub.f32 %v495, %v504
        %v514 = vsub.f32 %v496, %v505
        %v515 = vsub.f32 %v497, %v506
        %v516 = vsub.f32 %v498, %v507
        %v517 = vsub.f32 %v499, %v508
        %v518 = vsub.f32 %v500, %v509
        %v519 = vsub.f32 %v501, %v510
        %v520 = vsub.f32 %v502, %v511
        %v521 = vld [vmem:[#allocation2 + $0x7] sm:$0xff]
        %v522 = vld [vmem:[#allocation2 + $0xf] sm:$0xff]
        %v523 = vld [vmem:[#allocation2 + $0x17] sm:$0xff]
        %v524 = vld [vmem:[#allocation2 + $0x27] sm:$0xff]
        %v525 = vld [vmem:[#allocation2 + $0x2f] sm:$0xff]
        %v526 = vld [vmem:[#allocation2 + $0x37] sm:$0xff]
        %v527 = vld [vmem:[#allocation2 + $0x47] sm:$0xff]
        %v528 = vld [vmem:[#allocation2 + $0x4f] sm:$0xff]
        %v529 = vld [vmem:[#allocation2 + $0x57] sm:$0xff]
        %539 = vrot.lane.b32.xlu0 %v521, 2
        %v540 = vpop.permute.xlu0 %539
        %541 = vrot.lane.b32.xlu0 %v522, 2
        %v542 = vpop.permute.xlu0 %541
        %543 = vrot.lane.b32.xlu0 %v523, 2
        %v544 = vpop.permute.xlu0 %543
        %545 = vrot.lane.b32.xlu0 %v524, 2
        %v546 = vpop.permute.xlu0 %545
        %547 = vrot.lane.b32.xlu0 %v525, 2
        %v548 = vpop.permute.xlu0 %547
        %549 = vrot.lane.b32.xlu0 %v526, 2
        %v550 = vpop.permute.xlu0 %549
        %551 = vrot.lane.b32.xlu0 %v527, 2
        %v552 = vpop.permute.xlu0 %551
        %553 = vrot.lane.b32.xlu0 %v528, 2
        %v554 = vpop.permute.xlu0 %553
        %555 = vrot.lane.b32.xlu0 %v529, 2
        %v556 = vpop.permute.xlu0 %555
        %v566 = vsub.f32 %v521, %v540
        %v567 = vsub.f32 %v522, %v542
        %v568 = vsub.f32 %v523, %v544
        %v569 = vsub.f32 %v524, %v546
        %v570 = vsub.f32 %v525, %v548
        %v571 = vsub.f32 %v526, %v550
        %v572 = vsub.f32 %v527, %v552
        %v573 = vsub.f32 %v528, %v554
        %v574 = vsub.f32 %v529, %v556
        %v575 = vmul.f32 %v512, %v512
        %v576 = vmul.f32 %v513, %v513
        %v577 = vmul.f32 %v514, %v514
        %v578 = vmul.f32 %v515, %v515
        %v579 = vmul.f32 %v516, %v516
        %v580 = vmul.f32 %v517, %v517
        %v581 = vmul.f32 %v518, %v518
        %v582 = vmul.f32 %v519, %v519
        %v583 = vmul.f32 %v520, %v520
        %v584 = vmul.f32 %v566, %v566
        %v585 = vmul.f32 %v567, %v567
        %v586 = vmul.f32 %v568, %v568
        %v587 = vmul.f32 %v569, %v569
        %v588 = vmul.f32 %v570, %v570
        %v589 = vmul.f32 %v571, %v571
        %v590 = vmul.f32 %v572, %v572
        %v591 = vmul.f32 %v573, %v573
        %v592 = vmul.f32 %v574, %v574
        %602 = vrot.lane.b32.xlu0 %v584, 127
        %v603 = vpop.permute.xlu0 %602
        %604 = vrot.lane.b32.xlu0 %v585, 127
        %v605 = vpop.permute.xlu0 %604
        %606 = vrot.lane.b32.xlu0 %v586, 127
        %v607 = vpop.permute.xlu0 %606
        %608 = vrot.lane.b32.xlu0 %v587, 127
        %v609 = vpop.permute.xlu0 %608
        %610 = vrot.lane.b32.xlu0 %v588, 127
        %v611 = vpop.permute.xlu0 %610
        %612 = vrot.lane.b32.xlu0 %v589, 127
        %v613 = vpop.permute.xlu0 %612
        %614 = vrot.lane.b32.xlu0 %v590, 127
        %v615 = vpop.permute.xlu0 %614
        %616 = vrot.lane.b32.xlu0 %v591, 127
        %v617 = vpop.permute.xlu0 %616
        %618 = vrot.lane.b32.xlu0 %v592, 127
        %v619 = vpop.permute.xlu0 %618
        %v629 = vadd.f32 %v575, %v603
        %v630 = vadd.f32 %v576, %v605
        %v631 = vadd.f32 %v577, %v607
        %v632 = vadd.f32 %v578, %v609
        %v633 = vadd.f32 %v579, %v611
        %v634 = vadd.f32 %v580, %v613
        %v635 = vadd.f32 %v581, %v615
        %v636 = vadd.f32 %v582, %v617
        %v637 = vadd.f32 %v583, %v619
        %v638 = vadd.f32 %v629, 1e-06
        %v639 = vadd.f32 %v630, 1e-06
        %v640 = vadd.f32 %v631, 1e-06
        %v641 = vadd.f32 %v632, 1e-06
        %v642 = vadd.f32 %v633, 1e-06
        %v643 = vadd.f32 %v634, 1e-06
        %v644 = vadd.f32 %v635, 1e-06
        %v645 = vadd.f32 %v636, 1e-06
        %v646 = vadd.f32 %v637, 1e-06
        %v647 = vrsqrt.pop %v638
        %v648 = vmul.f32 %v638, %v647
        %vm649 = vcmp.eq.f32.partialorder %v638, inf
        %v650 = vsel %vm649, %v638, %v648
        %vm651 = vcmp.eq.f32.partialorder %v638, 0.0
        %v652 = vand.u32 %v638, 2147483648
        %v653 = vsel %vm651, %v652, %v650
        %v654 = vrsqrt.pop %v639
        %v655 = vmul.f32 %v639, %v654
        %vm656 = vcmp.eq.f32.partialorder %v639, inf
        %v657 = vsel %vm656, %v639, %v655
        %vm658 = vcmp.eq.f32.partialorder %v639, 0.0
        %v659 = vand.u32 %v639, 2147483648
        %v660 = vsel %vm658, %v659, %v657
        %v661 = vrsqrt.pop %v640
        %v662 = vmul.f32 %v640, %v661
        %vm663 = vcmp.eq.f32.partialorder %v640, inf
        %v664 = vsel %vm663, %v640, %v662
        %vm665 = vcmp.eq.f32.partialorder %v640, 0.0
        %v666 = vand.u32 %v640, 2147483648
        %v667 = vsel %vm665, %v666, %v664
        %v668 = vrsqrt.pop %v641
        %v669 = vmul.f32 %v641, %v668
        %vm670 = vcmp.eq.f32.partialorder %v641, inf
        %v671 = vsel %vm670, %v641, %v669
        %vm672 = vcmp.eq.f32.partialorder %v641, 0.0
        %v673 = vand.u32 %v641, 2147483648
        %v674 = vsel %vm672, %v673, %v671
        %v675 = vrsqrt.pop %v642
        %v676 = vmul.f32 %v642, %v675
        %vm677 = vcmp.eq.f32.partialorder %v642, inf
        %v678 = vsel %vm677, %v642, %v676
        %vm679 = vcmp.eq.f32.partialorder %v642, 0.0
        %v680 = vand.u32 %v642, 2147483648
        %v681 = vsel %vm679, %v680, %v678
        %v682 = vrsqrt.pop %v643
        %v683 = vmul.f32 %v643, %v682
        %vm684 = vcmp.eq.f32.partialorder %v643, inf
        %v685 = vsel %vm684, %v643, %v683
        %vm686 = vcmp.eq.f32.partialorder %v643, 0.0
        %v687 = vand.u32 %v643, 2147483648
        %v688 = vsel %vm686, %v687, %v685
        %v689 = vrsqrt.pop %v644
        %v690 = vmul.f32 %v644, %v689
        %vm691 = vcmp.eq.f32.partialorder %v644, inf
        %v692 = vsel %vm691, %v644, %v690
        %vm693 = vcmp.eq.f32.partialorder %v644, 0.0
        %v694 = vand.u32 %v644, 2147483648
        %v695 = vsel %vm693, %v694, %v692
        %v696 = vrsqrt.pop %v645
        %v697 = vmul.f32 %v645, %v696
        %vm698 = vcmp.eq.f32.partialorder %v645, inf
        %v699 = vsel %vm698, %v645, %v697
        %vm700 = vcmp.eq.f32.partialorder %v645, 0.0
        %v701 = vand.u32 %v645, 2147483648
        %v702 = vsel %vm700, %v701, %v699
        %v703 = vrsqrt.pop %v646
        %v704 = vmul.f32 %v646, %v703
        %vm705 = vcmp.eq.f32.partialorder %v646, inf
        %v706 = vsel %vm705, %v646, %v704
        %vm707 = vcmp.eq.f32.partialorder %v646, 0.0
        %v708 = vand.u32 %v646, 2147483648
        %v709 = vsel %vm707, %v708, %v706
        %719 = vrot.lane.b32.xlu0 %v653, 127
        %v720 = vpop.permute.xlu0 %719
        %721 = vrot.lane.b32.xlu0 %v660, 127
        %v722 = vpop.permute.xlu0 %721
        %723 = vrot.lane.b32.xlu0 %v667, 127
        %v724 = vpop.permute.xlu0 %723
        %725 = vrot.lane.b32.xlu0 %v674, 127
        %v726 = vpop.permute.xlu0 %725
        %727 = vrot.lane.b32.xlu0 %v681, 127
        %v728 = vpop.permute.xlu0 %727
        %729 = vrot.lane.b32.xlu0 %v688, 127
        %v730 = vpop.permute.xlu0 %729
        %731 = vrot.lane.b32.xlu0 %v695, 127
        %v732 = vpop.permute.xlu0 %731
        %733 = vrot.lane.b32.xlu0 %v702, 127
        %v734 = vpop.permute.xlu0 %733
        %735 = vrot.lane.b32.xlu0 %v709, 127
        %v736 = vpop.permute.xlu0 %735
        %vm746 = vcmask 146432
        %747 = vst.msk [vmem:[%s289] sm:$0xff] %vm746, %v720
        %748 = vst.msk [vmem:[%s289 + $0x8] sm:$0xff] %vm746, %v722
        %749 = vst.msk [vmem:[%s289 + $0x10] sm:$0xff] %vm746, %v724
        %750 = vst.msk [vmem:[%s289 + $0x18] sm:$0xff] %vm746, %v726
        %751 = vst.msk [vmem:[%s289 + $0x20] sm:$0xff] %vm746, %v728
        %752 = vst.msk [vmem:[%s289 + $0x28] sm:$0xff] %vm746, %v730
        %753 = vst.msk [vmem:[%s289 + $0x30] sm:$0xff] %vm746, %v732
        %754 = vst.msk [vmem:[%s289 + $0x38] sm:$0xff] %vm746, %v734
        %755 = vst.msk [vmem:[%s289 + $0x40] sm:$0xff] %vm746, %v736
        %s756 = smul.u32 3, %s24
        %p757 = scmp.lt.s32.totalorder %s23, 1
        %s758 = scalar_select %p757, %s23, 1
        %p759 = scmp.lt.s32.totalorder %s756, 2
        %s760 = scalar_select %p759, %s756, 2
        %s761 = smul.addr %s758, 9
        %s762 = sadd.s32 %s760, %s761
        %s763 = smul.addr %s762, 8
        %s764 = scalar_lea.vmem %s2, %s763
        // Predicated region
        $region45: #{tpu_custom_call.1} parent=27 // pred_check
          %p765 = pneg %p119
        $region46: #{tpu_custom_call.1} parent=27 // pred_check_branch
          %767 = sbr.rel (%p765) target = $region48
        $region47: #{tpu_custom_call.1} parent=27 // pred_region
          %s768 = smul.u32 3, %s24
        $region48: #{tpu_custom_call.1} parent=27 // pred_fallthru
          _
      $region28: #{tpu_custom_call.1} parent=5 // pred_fallthru
        _
      %p769 = scmp.le.s32.totalorder 2, %s14
      // Predicated region
      $region49: #{tpu_custom_call.1} parent=5 // pred_check
        %p770 = pneg %p769
      $region50: #{tpu_custom_call.1} parent=5 // pred_check_branch
        %772 = sbr.rel (%p770) target = $region52
      $region51: #{tpu_custom_call.1} parent=5 // pred_region
        %s773 = ssub.s32 %s14, 2
        // Predicated region
        $region53: #{tpu_custom_call.1} parent=51 // pred_check
          %p774 = pneg %p125
        $region54: #{tpu_custom_call.1} parent=51 // pred_check_branch
          %776 = sbr.rel (%p774) target = $region56
        $region55: #{tpu_custom_call.1} parent=51 // pred_region
          %s777 = smul.u32 3, %s26
          %p778 = scmp.lt.s32.totalorder %s25, 1
          %s779 = scalar_select %p778, %s25, 1
          %p780 = scmp.lt.s32.totalorder %s777, 2
          %s781 = scalar_select %p780, %s777, 2
          %s782 = smul.addr %s779, 9
          %s783 = sadd.s32 %s781, %s782
          %s784 = smul.addr %s783, 8
          %s785 = scalar_lea.vmem %s2, %s784
        $region56: #{tpu_custom_call.1} parent=51 // pred_fallthru
          _
      $region52: #{tpu_custom_call.1} parent=5 // pred_fallthru
        _
    $region6: #{tpu_custom_call.1} parent=1 // loop_footer
      %s18 = sadd.s32 1, %s14
    $region7: #{tpu_custom_call.1} parent=1 // loop_footer_branch
      %13 = sbr.rel target = $region3
    $region8: #{tpu_custom_call.1} parent=1 // loop_exit
      _
    %786 = vsyncpa [#allocation4], 1
    %s787 = scalar_lea.sflag [#allocation4], 1
    %788 = vsyncpa %s787, 1
    %789 = vsyncpa [#allocation6], 1
    %s790 = scalar_lea.sflag [#allocation6], 1
    %791 = vsyncpa %s790, 1

</llo_original>
